<compile_context>
chip_gen: v7x
topology: tpu7x:2x2x1
jax: 0.10.0
libtpu: 0.0.40
codegen_flags: <defaults>
</compile_context>

<pallas_src>
import functools

import jax
import jax.numpy as jnp
from jax.experimental import pallas as pl
from jax.experimental.pallas import tpu as pltpu

_LANES = 128
_SUBLANES = 8
_TILE_R_MAX = 1024          # 1024 x 128 x 4 B = 512 KiB per input block


def _cdiv(a, b):
    return -(-a // b)


def _loss_partial_kernel(x_ref, o_ref, *, blocks_per_split):
    """Accumulate sum(t * (t - 2*y)) for this split into a (1, 8, 128) f32 block."""
    s = pl.program_id(0)                    # split index ("parallel"; megacore on v7x)
    i = pl.program_id(1)                    # row-block index ("arbitrary"; reduction)

    @pl.when(i == 0)
    def _():
        o_ref[...] = jnp.zeros_like(o_ref)

    t = x_ref[...]                          # (TILE_R, 128) f32
    tile_r, lanes = t.shape

    # Global flat index of each element of this block in the flattened (B*6,) tensor.
    # (int32 is fine up to ~350M batch elements.)
    base = (s * blocks_per_split + i) * (tile_r * lanes)
    row = jax.lax.broadcasted_iota(jnp.int32, (tile_r, lanes), 0)
    col = jax.lax.broadcasted_iota(jnp.int32, (tile_r, lanes), 1)
    flat = base + row * lanes + col

    # Flattened y per 2x3 matrix is [1,0,0, 0,1,0]: ones where flat % 6 in {0, 4}.
    m6 = flat % 6
    w = jnp.where((m6 == 0) | (m6 == 4), 2.0, 0.0).astype(jnp.float32)   # == 2*y

    val = t * (t - w)                       # (TILE_R, 128); zero on padded elements
    # Reduce sublane groups with plain VPU adds (layout-trivial reshape, no XLU pass).
    partial = val.reshape(tile_r // _SUBLANES, _SUBLANES, lanes).sum(axis=0)
    o_ref[...] += partial[None]             # resident (1, 8, 128) accumulator


def identity_transform_loss(transform):
    """transform: (B, 2, 3) -> scalar f32 loss == ((transform - I)**2).sum(1).mean()."""
    transform = jnp.asarray(transform, dtype=jnp.float32)
    assert transform.ndim == 3 and transform.shape[1:] == (2, 3), transform.shape
    b = transform.shape[0]
    n = b * 6

    # NOTE: for tiny B the pallas_call fixed cost dominates and plain jnp (XLA-fused)
    # would be cheaper; we always take the kernel path here so the kernel is exercised.
    # TODO(synk): optionally bypass Pallas for very small B.

    # ---- lane-dense (rows_padded, 128) slab -------------------------------------
    rows = _cdiv(n, _LANES)
    tile_r = min(_TILE_R_MAX, _cdiv(rows, _SUBLANES) * _SUBLANES)
    num_blocks = _cdiv(rows, tile_r)
    num_splits = 2 if num_blocks >= 2 else 1            # v7x: one stream per TensorCore
    blocks_per_split = _cdiv(num_blocks, num_splits)
    rows_padded = num_splits * blocks_per_split * tile_r

    flat = jnp.pad(transform.reshape(-1), (0, rows_padded * _LANES - n))
    slab = flat.reshape(rows_padded, _LANES)

    kernel = functools.partial(_loss_partial_kernel,
                               blocks_per_split=blocks_per_split)
    partials = pl.pallas_call(
        kernel,
        out_shape=jax.ShapeDtypeStruct((num_splits, _SUBLANES, _LANES), jnp.float32),
        grid_spec=pltpu.PrefetchScalarGridSpec(
            num_scalar_prefetch=0,
            grid=(num_splits, blocks_per_split),
            in_specs=[
                pl.BlockSpec((tile_r, _LANES),
                             lambda s, i: (s * blocks_per_split + i, 0)),
            ],
            out_specs=pl.BlockSpec((1, _SUBLANES, _LANES), lambda s, i: (s, 0, 0)),
        ),
        compiler_params=pltpu.CompilerParams(
            dimension_semantics=("parallel", "arbitrary")),
    )(slab)

    # Epilogue: sum((t-y)^2) = raw + sum(y^2) = raw + 2B ; mean divides by 3B.
    raw = jnp.sum(partials)
    return (raw + jnp.float32(2.0 * b)) * jnp.float32(1.0 / (3.0 * b))


if __name__ == "__main__":
    key = jax.random.PRNGKey(0)
    k_small, k_big = jax.random.split(key)

    def ref_loss(t):
        y = jnp.array([[1.0, 0.0, 0.0], [0.0, 1.0, 0.0]], dtype=jnp.float32)
        return jnp.mean(jnp.sum((t - y[None]) ** 2, axis=1))

    # Small case (matches the module's usual per-sample 2x3 affine input).
    t_small = jax.random.normal(k_small, (8, 2, 3), dtype=jnp.float32)
    loss_small = jax.block_until_ready(identity_transform_loss(t_small))
    ref_small = ref_loss(t_small)
    assert jnp.allclose(loss_small, ref_small, rtol=1e-5, atol=1e-6), (loss_small, ref_small)

    # Larger case: exercises row tiling, the resident accumulator, zero padding of the
    # final block, and the two-way (megacore) split.
    t_big = jax.random.normal(k_big, (60000, 2, 3), dtype=jnp.float32)
    loss_big = jax.block_until_ready(identity_transform_loss(t_big))
    ref_big = ref_loss(t_big)
    assert jnp.allclose(loss_big, ref_big, rtol=1e-4, atol=1e-6), (loss_big, ref_big)

    print("KERNEL_OK")
</pallas_src>

<mosaic_0001>
module attributes {stable_mosaic.version = 11 : i64} {
  func.func @_loss_partial_kernel(%arg0: i32, %arg1: i32, %arg2: memref<8x128xf32, #tpu.memory_space<vmem>>, %arg3: memref<1x8x128xf32, #tpu.memory_space<vmem>>) attributes {dimension_semantics = [#tpu.dimension_semantics<parallel>, #tpu.dimension_semantics<arbitrary>], iteration_bounds = array<i64: 1, 1>, scalar_prefetch = 0 : i64, scratch_operands = 0 : i64, tpu.core_type = #tpu.core_type<tc>, window_params = [{transform_indices = @transform_0, window_bounds = array<i64: 8, 128>}, {transform_indices = @transform_1, window_bounds = array<i64: 1, 8, 128>}]} {
    %c0_i32 = arith.constant 0 : i32
    %0 = arith.cmpi eq, %arg1, %c0_i32 : i32
    %1 = arith.extui %0 : i1 to i32
    %c0_i32_0 = arith.constant 0 : i32
    %2 = arith.cmpi ne, %1, %c0_i32_0 : i32
    scf.if %2 {
      %cst_16 = arith.constant 0.000000e+00 : f32
      %46 = vector.broadcast %cst_16 : f32 to vector<1x8x128xf32>
      %c0_17 = arith.constant 0 : index
      %c0_18 = arith.constant 0 : index
      %c0_19 = arith.constant 0 : index
      %47 = vector.load %arg3[%c0_17, %c0_18, %c0_19] : memref<1x8x128xf32, #tpu.memory_space<vmem>>, vector<1x8x128xf32>
      tpu.vector_store %arg3[%c0_17, %c0_18, %c0_19], %46 {strides = array<i32>} : memref<1x8x128xf32, #tpu.memory_space<vmem>>, vector<1x8x128xf32>,
    } else {
    }
    %c0 = arith.constant 0 : index
    %c0_1 = arith.constant 0 : index
    %3 = vector.load %arg2[%c0, %c0_1] : memref<8x128xf32, #tpu.memory_space<vmem>>, vector<8x128xf32>
    %c1_i32 = arith.constant 1 : i32
    %4 = arith.muli %arg0, %c1_i32 : i32
    %5 = arith.addi %4, %arg1 : i32
    %c1024_i32 = arith.constant 1024 : i32
    %6 = arith.muli %5, %c1024_i32 : i32
    %7 = tpu.iota {dimensions = array<i32: 0>} : vector<8x128xi32>
    %8 = tpu.iota {dimensions = array<i32: 1>} : vector<8x128xi32>
    %c128_i32 = arith.constant 128 : i32
    %9 = vector.broadcast %c128_i32 : i32 to vector<8x128xi32>
    %10 = arith.muli %7, %9 : vector<8x128xi32>
    %11 = vector.broadcast %6 : i32 to vector<8x128xi32>
    %12 = arith.addi %11, %10 : vector<8x128xi32>
    %13 = arith.addi %12, %8 : vector<8x128xi32>
    %c6_i32 = arith.constant 6 : i32
    %c0_i32_2 = arith.constant 0 : i32
    %14 = arith.cmpi eq, %c6_i32, %c0_i32_2 : i32
    %c1_i32_3 = arith.constant 1 : i32
    %15 = arith.select %14, %c1_i32_3, %c6_i32 : i32
    %16 = vector.broadcast %15 : i32 to vector<8x128xi32>
    %17 = arith.remsi %13, %16 : vector<8x128xi32>
    %c0_i32_4 = arith.constant 0 : i32
    %18 = vector.broadcast %c0_i32_4 : i32 to vector<8x128xi32>
    %19 = arith.cmpi ne, %17, %18 : vector<8x128xi32>
    %c0_i32_5 = arith.constant 0 : i32
    %20 = vector.broadcast %c0_i32_5 : i32 to vector<8x128xi32>
    %21 = arith.cmpi slt, %17, %20 : vector<8x128xi32>
    %c0_i32_6 = arith.constant 0 : i32
    %22 = arith.cmpi slt, %15, %c0_i32_6 : i32
    %23 = vector.broadcast %22 : i1 to vector<8x128xi1>
    %24 = vector.broadcast %23 : vector<8x128xi1> to vector<8x128xi1>
    %25 = arith.xori %21, %24 : vector<8x128xi1>
    %26 = arith.andi %25, %19 : vector<8x128xi1>
    %27 = vector.broadcast %15 : i32 to vector<8x128xi32>
    %28 = arith.addi %17, %27 : vector<8x128xi32>
    %29 = arith.select %26, %28, %17 : vector<8x128xi1>, vector<8x128xi32>
    %c0_i32_7 = arith.constant 0 : i32
    %30 = vector.broadcast %c0_i32_7 : i32 to vector<8x128xi32>
    %31 = arith.cmpi eq, %29, %30 : vector<8x128xi32>
    %c4_i32 = arith.constant 4 : i32
    %32 = vector.broadcast %c4_i32 : i32 to vector<8x128xi32>
    %33 = arith.cmpi eq, %29, %32 : vector<8x128xi32>
    %34 = arith.ori %31, %33 : vector<8x128xi1>
    %cst = arith.constant 2.000000e+00 : f32
    %cst_8 = arith.constant 0.000000e+00 : f32
    %35 = vector.broadcast %cst : f32 to vector<8x128xf32>
    %36 = vector.broadcast %cst_8 : f32 to vector<8x128xf32>
    %37 = arith.select %34, %35, %36 : vector<8x128xi1>, vector<8x128xf32>
    %38 = arith.subf %3, %37 : vector<8x128xf32>
    %39 = arith.mulf %3, %38 : vector<8x128xf32>
    %40 = vector.shape_cast %39 : vector<8x128xf32> to vector<1x8x128xf32>
    %cst_9 = arith.constant dense<0.000000e+00> : vector<8x128xf32>
    %41 = vector.multi_reduction <add>, %40, %cst_9 [0] : vector<1x8x128xf32> to vector<8x128xf32>
    %c0_10 = arith.constant 0 : index
    %c0_11 = arith.constant 0 : index
    %c0_12 = arith.constant 0 : index
    %42 = vector.load %arg3[%c0_10, %c0_11, %c0_12] : memref<1x8x128xf32, #tpu.memory_space<vmem>>, vector<1x8x128xf32>
    %43 = vector.shape_cast %41 : vector<8x128xf32> to vector<1x8x128xf32>
    %44 = arith.addf %42, %43 : vector<1x8x128xf32>
    %c0_13 = arith.constant 0 : index
    %c0_14 = arith.constant 0 : index
    %c0_15 = arith.constant 0 : index
    %45 = vector.load %arg3[%c0_13, %c0_14, %c0_15] : memref<1x8x128xf32, #tpu.memory_space<vmem>>, vector<1x8x128xf32>
    tpu.vector_store %arg3[%c0_13, %c0_14, %c0_15], %44 {strides = array<i32>} : memref<1x8x128xf32, #tpu.memory_space<vmem>>, vector<1x8x128xf32>,
    return
  }
  func.func @transform_0(%arg0: i32, %arg1: i32) -> (i32, i32) {
    %c1_i32 = arith.constant 1 : i32
    %0 = arith.muli %arg0, %c1_i32 : i32
    %1 = arith.addi %0, %arg1 : i32
    %c0_i32 = arith.constant 0 : i32
    %c0_i32_0 = arith.constant 0 : i32
    return %1, %c0_i32 : i32, i32
  }
  func.func @transform_1(%arg0: i32, %arg1: i32) -> (i32, i32, i32) {
    %c0_i32 = arith.constant 0 : i32
    %c0_i32_0 = arith.constant 0 : i32
    %c0_i32_1 = arith.constant 0 : i32
    return %arg0, %c0_i32, %c0_i32_0 : i32, i32, i32
  }
}

</mosaic_0001>

<llo_original>
// kernel: tpu_custom_call.1
$region0: #{tpu_custom_call.1}
  #allocation0 [shape = 'u32[]', space=smem, size = 0x4, offset = 0x4, fixed_abs, tag = 'smem constant byte address 0x4 - core index']
  #allocation1 [shape = 'u32[144,128]{1,0:T(1,128)}', space=vmem, size = 0x12000, scoped, tag = 'internal scratch']
  %s0 = inlined_call_operand.hbm [shape: f32[8,128], index: 0, kind: input, shape index: {}]
  %s1 = inlined_call_operand.hbm [shape: f32[1,8,128], index: 1, kind: output, shape index: {}]
  %s2 = sld [smem:[#allocation0]]
  $region22: #{tpu_custom_call.1} parent=0
    _
  %s4 = ssub.s32 1, %s2
  %s5 = scalar_select 0, %s4, %s2
  $region1: #{tpu_custom_call.1} parent=0
    #allocation2 [shape = 'u8[4096]{0}', space=vmem, size = 0x1000, scoped, tag = 'input window, operand 0, single buffered']
    #allocation3 [shape = 's32[1]{0}', space=sflag, size = 0x4, scoped, tag = 'scoped memory for tpu_custom_call.1']
    #allocation4 [shape = 's32[1]{0}', space=sflag, size = 0x4, scoped, tag = 'scoped memory for tpu_custom_call.1']
    #allocation5 [shape = 'u8[4096]{0}', space=vmem, size = 0x1000, scoped, tag = 'output window, operand 0, single buffered']
    %6 = vsyncpa [#allocation3], 0
    %7 = vsyncpa [#allocation4], 0
    // Predicated region
    $region2: #{tpu_custom_call.1} parent=1 // pred_check
      _
    $region3: #{tpu_custom_call.1} parent=1 // pred_check_branch
      %9 = sbr.rel (0) target = $region5
    $region4: #{tpu_custom_call.1} parent=1 // pred_region
      %s10 = sadd.s32 0, 0
      %s12 = ssub.s32 128, 128
      %13 = vsyncadd [#allocation3], %s12
      %s14 = smul.addr %s10, 128
      %s15 = scalar_lea.hbm %s0, %s14
      %s17 = sshll.u32 [#allocation2], 4
      %s18 = int_to_ptr.vmem [resolvable:$true] %s17
      %20 = dma.hbm_to_vmem [thread:$0]  %s15, 128, %s18, [#allocation3]
    $region5: #{tpu_custom_call.1} parent=1 // pred_fallthru
      _
    // Predicated region
    $region6: #{tpu_custom_call.1} parent=1 // pred_check
      _
    $region7: #{tpu_custom_call.1} parent=1 // pred_check_branch
      %22 = sbr.rel (0) target = $region9
    $region8: #{tpu_custom_call.1} parent=1 // pred_region
      %23 = dma.done [#allocation3], 128
    $region9: #{tpu_custom_call.1} parent=1 // pred_fallthru
      _
    %s24 = sadd.s32 0, 0
    %p25 = scmp.eq.s32.totalorder 0, 0
    // Predicated region
    $region10: #{tpu_custom_call.1} parent=1 // pred_check
      %p26 = pneg %p25
    $region11: #{tpu_custom_call.1} parent=1 // pred_check_branch
      %28 = sbr.rel (%p26) target = $region13
    $region12: #{tpu_custom_call.1} parent=1 // pred_region
      %29 = vst [vmem:[#allocation5] sm:$0xff] 0.0
    $region13: #{tpu_custom_call.1} parent=1 // pred_fallthru
      _
    %v30 = vld [vmem:[#allocation2] sm:$0xff]
    %s31 = sadd.s32 0, 0
    %s32 = smul.u32 %s31, 1024
    %v33 = vlaneseq
    %v34 = vshrl.u32 %v33, 7
    %v35 = vlaneseq
    %v36 = vand.u32 %v35, 127
    %v37 = vmul.u32 %v34, 128
    %v38 = vstv %s32
    %v39 = vadd.s32 %v38, %v37
    %v40 = vadd.s32 %v39, %v36
    %vm41 = vcmp.lt.s32.totalorder %v40, 0
    %v42 = vsub.s32 0, %v40
    %v43 = vsel %vm41, %v42, %v40
    %v44 = vmul.u32.u64.compose %v43, 2863311531
    %v45 = vextract.low.u32 %v44
    %v46 = vextract.high.u32 %v44
    %v47 = vshrl.u32 %v46, 2
    %v48 = vmul.u32 %v47, 6
    %v49 = vsub.s32 %v43, %v48
    %v50 = vsub.s32 0, %v49
    %v51 = vsel %vm41, %v50, %v49
    %vm52 = vcmp.ne.s32.totalorder %v51, 0
    %vm53 = vcmp.lt.s32.totalorder %v51, 0
    %vm54 = vmand %vm53, %vm52
    %v55 = vadd.s32 %v51, 6
    %v56 = vsel %vm54, %v55, %v51
    %vm57 = vcmp.eq.s32.totalorder %v56, 0
    %vm58 = vcmp.eq.s32.totalorder %v56, 4
    %vm59 = vmor %vm57, %vm58
    %v60 = vsel %vm59, 2.0, 0.0
    %v61 = vsub.f32 %v30, %v60
    %v62 = vmul.f32 %v30, %v61
    %v63 = vadd.f32 %v62, 0.0
    %v64 = vld [vmem:[#allocation5] sm:$0xff]
    %v65 = vadd.f32 %v64, %v63
    %66 = vst [vmem:[#allocation5] sm:$0xff] %v65
    // Predicated region
    $region14: #{tpu_custom_call.1} parent=1 // pred_check
      _
    $region15: #{tpu_custom_call.1} parent=1 // pred_check_branch
      %68 = sbr.rel (0) target = $region17
    $region16: #{tpu_custom_call.1} parent=1 // pred_region
      %s70 = ssub.s32 128, 128
      %71 = vsyncadd [#allocation4], %s70
      %s73 = sshll.u32 [#allocation5], 4
      %s74 = int_to_ptr.vmem [resolvable:$true] %s73
      %76 = dma.vmem_to_hbm [thread:$0]  %s74, 128, %s1, [#allocation4]
    $region17: #{tpu_custom_call.1} parent=1 // pred_fallthru
      _
    // Predicated region
    $region18: #{tpu_custom_call.1} parent=1 // pred_check
      _
    $region19: #{tpu_custom_call.1} parent=1 // pred_check_branch
      %78 = sbr.rel (0) target = $region21
    $region20: #{tpu_custom_call.1} parent=1 // pred_region
      %79 = dma.done [#allocation4], 128
    $region21: #{tpu_custom_call.1} parent=1 // pred_fallthru
      _
    %80 = vsyncpa [#allocation3], 1
    %81 = vsyncpa [#allocation4], 1

</llo_original>
